<compile_context>
chip_gen: v7x
topology: tpu7x:2x2x1
jax: 0.10.0
libtpu: 0.0.40
codegen_flags: <defaults>
</compile_context>

<pallas_src>
import functools

import jax
import jax.numpy as jnp
from jax.experimental import pallas as pl
from jax.experimental.pallas import tpu as pltpu

BN_EPS = 1e-5
LEAKY_SLOPE = 0.01
LANE = 128


def _round_up(n, m=LANE):
    return ((n + m - 1) // m) * m


def _pad_to(a, shape):
    return jnp.pad(a, [(0, t - s) for s, t in zip(a.shape, shape)])


def _bn_leaky(h):
    # BatchNorm1d in training mode (gamma=1, beta=0, biased variance) + LeakyReLU(0.01).
    mean = jnp.mean(h, axis=0, keepdims=True)
    c = h - mean
    var = jnp.mean(c * c, axis=0, keepdims=True)
    h = c * jax.lax.rsqrt(var + BN_EPS)
    # LeakyReLU: max(h, slope*h) == where(h>=0, h, slope*h) for 0 < slope < 1.
    return jnp.maximum(h, LEAKY_SLOPE * h)


def _fused_mlp_kernel(num_blocks, x_ref, *refs):
    """Whole network for one complete BN batch (one grid step).

    refs = (w1_0, w2_0, ..., w1_{B-1}, w2_{B-1}, wf, bf, o_ref).
    Weights are pre-transposed to (in, out); lane dims padded to 128.
    Per-block Linear biases are omitted (cancelled by BN mean subtraction).
    """
    o_ref = refs[-1]
    wf_ref = refs[2 * num_blocks]
    bf_ref = refs[2 * num_blocks + 1]

    h = x_ref[...]
    for b in range(num_blocks):
        w1 = refs[2 * b][...]
        w2 = refs[2 * b + 1][...]
        h = _bn_leaky(jnp.dot(h, w1, preferred_element_type=jnp.float32))
        h = _bn_leaky(jnp.dot(h, w2, preferred_element_type=jnp.float32))
        # Dropout(p=0.0) == identity.

    o_ref[...] = (jnp.dot(h, wf_ref[...], preferred_element_type=jnp.float32)
                  + bf_ref[...]).astype(o_ref.dtype)


def fused_mlp_groups(x_groups, padded_blocks, wf_p, bf_p):
    """x_groups: (G, n, in_features) — G independent BN batches of n samples."""
    G, n, in_f = x_groups.shape
    out_fp = wf_p.shape[1]
    num_blocks = len(padded_blocks)

    weights = []
    for (w1, w2) in padded_blocks:
        weights.extend((w1, w2))
    args = [x_groups] + weights + [wf_p, bf_p]

    # x / out blocked on the leading group axis (squeezed inside the kernel);
    # weights get constant index_maps -> resident in VMEM across grid steps.
    in_specs = [pl.BlockSpec((None, n, in_f), lambda g: (g, 0, 0))]
    for w in weights:
        in_specs.append(pl.BlockSpec(w.shape, lambda g: (0, 0)))
    in_specs.append(pl.BlockSpec(wf_p.shape, lambda g: (0, 0)))
    in_specs.append(pl.BlockSpec(bf_p.shape, lambda g: (0, 0)))
    out_specs = pl.BlockSpec((None, n, out_fp), lambda g: (g, 0, 0))

    # Advisory cost estimate for XLA scheduling around the fused call.
    flops = 2 * n * wf_p.shape[0] * wf_p.shape[1]
    transcendentals = 0
    param_bytes = (wf_p.size + bf_p.size) * 4
    max_feat = out_fp
    for (w1, w2) in padded_blocks:
        flops += 2 * n * (w1.shape[0] * w1.shape[1] + w2.shape[0] * w2.shape[1])
        transcendentals += w1.shape[1] + w2.shape[1]  # one rsqrt per BN column
        param_bytes += (w1.size + w2.size) * 4
        max_feat = max(max_feat, w1.shape[1], w2.shape[1])
    flops *= G
    transcendentals *= G
    bytes_accessed = param_bytes + G * (n * in_f + n * out_fp) * 4

    # Right-size the scoped VMEM limit to the actual working set (v7x has only
    # 64 MiB/TC physical).  Factor 4 covers double-buffered x/out blocks plus
    # activation temporaries; clamp to [2 MiB, 32 MiB].
    working = param_bytes + (n * in_f + n * out_fp + 2 * n * max_feat) * 4
    vmem_bytes = int(min(32 << 20, max(2 << 20, 4 * working + (1 << 20))))

    return pl.pallas_call(
        functools.partial(_fused_mlp_kernel, num_blocks),
        out_shape=jax.ShapeDtypeStruct((G, n, out_fp), jnp.float32),
        grid_spec=pltpu.PrefetchScalarGridSpec(
            num_scalar_prefetch=0,
            grid=(G,),
            in_specs=in_specs,
            out_specs=out_specs,
        ),
        cost_estimate=pl.CostEstimate(flops=flops,
                                      transcendentals=transcendentals,
                                      bytes_accessed=bytes_accessed),
        compiler_params=pltpu.CompilerParams(
            dimension_semantics=("parallel",),
            vmem_limit_bytes=vmem_bytes),
    )(*args)


def init_linear_params(key, in_f, out_f):
    """kaiming_normal_ (fan_in, leaky_relu a=0 -> std = sqrt(2/in_f)) for W,
    default torch bias init U(-1/sqrt(in_f), 1/sqrt(in_f))."""
    kw, kb = jax.random.split(key)
    std = (2.0 / in_f) ** 0.5
    # Stored pre-transposed as (in_f, out_f) for x @ W.
    w = jax.random.normal(kw, (in_f, out_f), jnp.float32) * std
    bound = 1.0 / (in_f ** 0.5)
    b = jax.random.uniform(kb, (1, out_f), jnp.float32, -bound, bound)
    return w, b


def build_model_params(key, in_features, hidden_features, out_features):
    params = {"blocks": [], "final": None}
    dims = [in_features] + list(hidden_features)
    for i in range(len(hidden_features)):
        key, k1, k2 = jax.random.split(key, 3)
        w1, b1 = init_linear_params(k1, dims[i], dims[i + 1])
        w2, b2 = init_linear_params(k2, dims[i + 1], dims[i + 1])
        params["blocks"].append((w1, b1, w2, b2))
    key, kf = jax.random.split(key)
    params["final"] = init_linear_params(kf, hidden_features[-1], out_features)
    return params


def pad_params_for_kernel(params):
    """Zero-pad weight lane (output) dims to multiples of 128 and K dims of
    every layer except the first (which consumes the unpadded x).  Drop the
    BN-cancelled per-block biases.  Padded lane columns stay exactly zero
    through Linear -> BN -> LeakyReLU, so real outputs are unchanged."""
    padded_blocks = []
    first = True
    for (w1, _b1, w2, _b2) in params["blocks"]:
        k1 = w1.shape[0] if first else _round_up(w1.shape[0])
        w1p = _pad_to(w1, (k1, _round_up(w1.shape[1])))
        w2p = _pad_to(w2, (_round_up(w2.shape[0]), _round_up(w2.shape[1])))
        padded_blocks.append((w1p, w2p))
        first = False
    wf, bf = params["final"]
    wf_p = _pad_to(wf, (_round_up(wf.shape[0]), _round_up(wf.shape[1])))
    bf_p = _pad_to(bf, (1, _round_up(bf.shape[1])))
    return padded_blocks, wf_p, bf_p


@functools.partial(jax.jit, static_argnames=("out_features",))
def model_forward_groups(x_groups, padded_blocks, wf_p, bf_p, *, out_features):
    """x_groups: (G, batch, in_features) — G independent full BN batches."""
    out_p = fused_mlp_groups(x_groups, padded_blocks, wf_p, bf_p)
    # NOTE: if the consumer can read the lane-dense 128-wide output directly,
    # drop this slice to save one tiny XLA launch.
    return out_p[..., :out_features]


@functools.partial(jax.jit, static_argnames=("out_features",))
def model_forward(x, padded_blocks, wf_p, bf_p, *, out_features):
    """x: (batch, in_features) — exact semantics of Model.forward (one BN batch)."""
    out_p = fused_mlp_groups(x[None], padded_blocks, wf_p, bf_p)
    return out_p[0, :, :out_features]


def _reference_forward(x, params):
    # Pure-JAX reference, faithful to the PyTorch math (including b1/b2).
    def bn_leaky(h):
        mean = jnp.mean(h, axis=0, keepdims=True)
        var = jnp.mean((h - mean) ** 2, axis=0, keepdims=True)
        h = (h - mean) * jax.lax.rsqrt(var + BN_EPS)
        return jnp.where(h >= 0, h, LEAKY_SLOPE * h)

    for (w1, b1, w2, b2) in params["blocks"]:
        x = bn_leaky(x @ w1 + b1)
        x = bn_leaky(x @ w2 + b2)
    wf, bf = params["final"]
    return x @ wf + bf


if __name__ == "__main__":
    key = jax.random.PRNGKey(0)
    key, kx, kg, kp = jax.random.split(key, 4)

    batch = 8
    in_features = 32
    hidden_features = [64, 32]
    out_features = 16

    params = build_model_params(kp, in_features, hidden_features, out_features)
    padded_blocks, wf_p, bf_p = pad_params_for_kernel(params)

    # --- single-batch path (exact Model.forward semantics) ---
    x = jax.random.normal(kx, (batch, in_features), jnp.float32)
    out = model_forward(x, padded_blocks, wf_p, bf_p, out_features=out_features)
    out = jax.block_until_ready(out)
    ref = _reference_forward(x, params)
    assert out.shape == (batch, out_features)
    assert jnp.allclose(out, ref, atol=1e-4, rtol=1e-4), float(
        jnp.max(jnp.abs(out - ref)))

    # --- grid path: several independent BN batches in one call (parallel axis) ---
    G = 4
    x_groups = jax.random.normal(kg, (G, batch, in_features), jnp.float32)
    out_g = model_forward_groups(x_groups, padded_blocks, wf_p, bf_p,
                                 out_features=out_features)
    out_g = jax.block_until_ready(out_g)
    ref_g = jax.vmap(lambda xg: _reference_forward(xg, params))(x_groups)
    assert out_g.shape == (G, batch, out_features)
    assert jnp.allclose(out_g, ref_g, atol=1e-4, rtol=1e-4), float(
        jnp.max(jnp.abs(out_g - ref_g)))

    print("KERNEL_OK")
</pallas_src>

<mosaic_0001>
module attributes {stable_mosaic.version = 11 : i64} {
  func.func @_fused_mlp_kernel(%arg0: i32, %arg1: memref<1x8x32xf32, #tpu.memory_space<vmem>>, %arg2: memref<32x128xf32, #tpu.memory_space<vmem>>, %arg3: memref<128x128xf32, #tpu.memory_space<vmem>>, %arg4: memref<128x128xf32, #tpu.memory_space<vmem>>, %arg5: memref<128x128xf32, #tpu.memory_space<vmem>>, %arg6: memref<128x128xf32, #tpu.memory_space<vmem>>, %arg7: memref<1x128xf32, #tpu.memory_space<vmem>>, %arg8: memref<1x8x128xf32, #tpu.memory_space<vmem>>) attributes {dimension_semantics = [#tpu.dimension_semantics<parallel>], iteration_bounds = array<i64: 1>, scalar_prefetch = 0 : i64, scratch_operands = 0 : i64, tpu.core_type = #tpu.core_type<tc>, window_params = [{transform_indices = @transform_0, window_bounds = array<i64: 1, 8, 32>}, {pipeline_mode = #tpu.pipeline_mode<synchronous>, transform_indices = @transform_1, window_bounds = array<i64: 32, 128>}, {pipeline_mode = #tpu.pipeline_mode<synchronous>, transform_indices = @transform_2, window_bounds = array<i64: 128, 128>}, {pipeline_mode = #tpu.pipeline_mode<synchronous>, transform_indices = @transform_3, window_bounds = array<i64: 128, 128>}, {pipeline_mode = #tpu.pipeline_mode<synchronous>, transform_indices = @transform_4, window_bounds = array<i64: 128, 128>}, {pipeline_mode = #tpu.pipeline_mode<synchronous>, transform_indices = @transform_5, window_bounds = array<i64: 128, 128>}, {pipeline_mode = #tpu.pipeline_mode<synchronous>, transform_indices = @transform_6, window_bounds = array<i64: 1, 128>}, {transform_indices = @transform_7, window_bounds = array<i64: 1, 8, 128>}]} {
    %c0 = arith.constant 0 : index
    %c0_0 = arith.constant 0 : index
    %c0_1 = arith.constant 0 : index
    %0 = vector.load %arg1[%c0, %c0_0, %c0_1] : memref<1x8x32xf32, #tpu.memory_space<vmem>>, vector<1x8x32xf32>
    %1 = vector.shape_cast %0 : vector<1x8x32xf32> to vector<8x32xf32>
    %c0_2 = arith.constant 0 : index
    %c0_3 = arith.constant 0 : index
    %2 = vector.load %arg2[%c0_2, %c0_3] : memref<32x128xf32, #tpu.memory_space<vmem>>, vector<32x128xf32>
    %c0_4 = arith.constant 0 : index
    %c0_5 = arith.constant 0 : index
    %3 = vector.load %arg3[%c0_4, %c0_5] : memref<128x128xf32, #tpu.memory_space<vmem>>, vector<128x128xf32>
    %cst = arith.constant dense<0.000000e+00> : vector<8x128xf32>
    %4 = tpu.matmul %1, %2, %cst {dimension_numbers = #tpu.dot_dimension_numbers<[1], [0], [0], [1], [0, 0, 1, 1], [], []>} : vector<8x32xf32>, vector<32x128xf32>, vector<8x128xf32> -> vector<8x128xf32>
    %cst_6 = arith.constant dense<0.000000e+00> : vector<128xf32>
    %5 = vector.multi_reduction <add>, %4, %cst_6 [0] : vector<8x128xf32> to vector<128xf32>
    %6 = vector.shape_cast %5 : vector<128xf32> to vector<1x128xf32>
    %cst_7 = arith.constant 8.000000e+00 : f32
    %7 = vector.broadcast %cst_7 : f32 to vector<1x128xf32>
    %8 = arith.divf %6, %7 : vector<1x128xf32>
    %9 = vector.broadcast %8 : vector<1x128xf32> to vector<8x128xf32>
    %10 = arith.subf %4, %9 : vector<8x128xf32>
    %11 = arith.mulf %10, %10 : vector<8x128xf32>
    %cst_8 = arith.constant dense<0.000000e+00> : vector<128xf32>
    %12 = vector.multi_reduction <add>, %11, %cst_8 [0] : vector<8x128xf32> to vector<128xf32>
    %13 = vector.shape_cast %12 : vector<128xf32> to vector<1x128xf32>
    %cst_9 = arith.constant 8.000000e+00 : f32
    %14 = vector.broadcast %cst_9 : f32 to vector<1x128xf32>
    %15 = arith.divf %13, %14 : vector<1x128xf32>
    %cst_10 = arith.constant 9.99999974E-6 : f32
    %16 = vector.broadcast %cst_10 : f32 to vector<1x128xf32>
    %17 = arith.addf %15, %16 : vector<1x128xf32>
    %18 = math.rsqrt %17 : vector<1x128xf32>
    %19 = vector.broadcast %18 : vector<1x128xf32> to vector<8x128xf32>
    %20 = arith.mulf %10, %19 : vector<8x128xf32>
    %cst_11 = arith.constant 0.00999999977 : f32
    %21 = vector.broadcast %cst_11 : f32 to vector<8x128xf32>
    %22 = arith.mulf %21, %20 : vector<8x128xf32>
    %23 = arith.maximumf %20, %22 : vector<8x128xf32>
    %cst_12 = arith.constant dense<0.000000e+00> : vector<8x128xf32>
    %24 = tpu.matmul %23, %3, %cst_12 {dimension_numbers = #tpu.dot_dimension_numbers<[1], [0], [0], [1], [0, 0, 1, 1], [], []>} : vector<8x128xf32>, vector<128x128xf32>, vector<8x128xf32> -> vector<8x128xf32>
    %cst_13 = arith.constant dense<0.000000e+00> : vector<128xf32>
    %25 = vector.multi_reduction <add>, %24, %cst_13 [0] : vector<8x128xf32> to vector<128xf32>
    %26 = vector.shape_cast %25 : vector<128xf32> to vector<1x128xf32>
    %cst_14 = arith.constant 8.000000e+00 : f32
    %27 = vector.broadcast %cst_14 : f32 to vector<1x128xf32>
    %28 = arith.divf %26, %27 : vector<1x128xf32>
    %29 = vector.broadcast %28 : vector<1x128xf32> to vector<8x128xf32>
    %30 = arith.subf %24, %29 : vector<8x128xf32>
    %31 = arith.mulf %30, %30 : vector<8x128xf32>
    %cst_15 = arith.constant dense<0.000000e+00> : vector<128xf32>
    %32 = vector.multi_reduction <add>, %31, %cst_15 [0] : vector<8x128xf32> to vector<128xf32>
    %33 = vector.shape_cast %32 : vector<128xf32> to vector<1x128xf32>
    %cst_16 = arith.constant 8.000000e+00 : f32
    %34 = vector.broadcast %cst_16 : f32 to vector<1x128xf32>
    %35 = arith.divf %33, %34 : vector<1x128xf32>
    %cst_17 = arith.constant 9.99999974E-6 : f32
    %36 = vector.broadcast %cst_17 : f32 to vector<1x128xf32>
    %37 = arith.addf %35, %36 : vector<1x128xf32>
    %38 = math.rsqrt %37 : vector<1x128xf32>
    %39 = vector.broadcast %38 : vector<1x128xf32> to vector<8x128xf32>
    %40 = arith.mulf %30, %39 : vector<8x128xf32>
    %cst_18 = arith.constant 0.00999999977 : f32
    %41 = vector.broadcast %cst_18 : f32 to vector<8x128xf32>
    %42 = arith.mulf %41, %40 : vector<8x128xf32>
    %43 = arith.maximumf %40, %42 : vector<8x128xf32>
    %c0_19 = arith.constant 0 : index
    %c0_20 = arith.constant 0 : index
    %44 = vector.load %arg4[%c0_19, %c0_20] : memref<128x128xf32, #tpu.memory_space<vmem>>, vector<128x128xf32>
    %c0_21 = arith.constant 0 : index
    %c0_22 = arith.constant 0 : index
    %45 = vector.load %arg5[%c0_21, %c0_22] : memref<128x128xf32, #tpu.memory_space<vmem>>, vector<128x128xf32>
    %cst_23 = arith.constant dense<0.000000e+00> : vector<8x128xf32>
    %46 = tpu.matmul %43, %44, %cst_23 {dimension_numbers = #tpu.dot_dimension_numbers<[1], [0], [0], [1], [0, 0, 1, 1], [], []>} : vector<8x128xf32>, vector<128x128xf32>, vector<8x128xf32> -> vector<8x128xf32>
    %cst_24 = arith.constant dense<0.000000e+00> : vector<128xf32>
    %47 = vector.multi_reduction <add>, %46, %cst_24 [0] : vector<8x128xf32> to vector<128xf32>
    %48 = vector.shape_cast %47 : vector<128xf32> to vector<1x128xf32>
    %cst_25 = arith.constant 8.000000e+00 : f32
    %49 = vector.broadcast %cst_25 : f32 to vector<1x128xf32>
    %50 = arith.divf %48, %49 : vector<1x128xf32>
    %51 = vector.broadcast %50 : vector<1x128xf32> to vector<8x128xf32>
    %52 = arith.subf %46, %51 : vector<8x128xf32>
    %53 = arith.mulf %52, %52 : vector<8x128xf32>
    %cst_26 = arith.constant dense<0.000000e+00> : vector<128xf32>
    %54 = vector.multi_reduction <add>, %53, %cst_26 [0] : vector<8x128xf32> to vector<128xf32>
    %55 = vector.shape_cast %54 : vector<128xf32> to vector<1x128xf32>
    %cst_27 = arith.constant 8.000000e+00 : f32
    %56 = vector.broadcast %cst_27 : f32 to vector<1x128xf32>
    %57 = arith.divf %55, %56 : vector<1x128xf32>
    %cst_28 = arith.constant 9.99999974E-6 : f32
    %58 = vector.broadcast %cst_28 : f32 to vector<1x128xf32>
    %59 = arith.addf %57, %58 : vector<1x128xf32>
    %60 = math.rsqrt %59 : vector<1x128xf32>
    %61 = vector.broadcast %60 : vector<1x128xf32> to vector<8x128xf32>
    %62 = arith.mulf %52, %61 : vector<8x128xf32>
    %cst_29 = arith.constant 0.00999999977 : f32
    %63 = vector.broadcast %cst_29 : f32 to vector<8x128xf32>
    %64 = arith.mulf %63, %62 : vector<8x128xf32>
    %65 = arith.maximumf %62, %64 : vector<8x128xf32>
    %cst_30 = arith.constant dense<0.000000e+00> : vector<8x128xf32>
    %66 = tpu.matmul %65, %45, %cst_30 {dimension_numbers = #tpu.dot_dimension_numbers<[1], [0], [0], [1], [0, 0, 1, 1], [], []>} : vector<8x128xf32>, vector<128x128xf32>, vector<8x128xf32> -> vector<8x128xf32>
    %cst_31 = arith.constant dense<0.000000e+00> : vector<128xf32>
    %67 = vector.multi_reduction <add>, %66, %cst_31 [0] : vector<8x128xf32> to vector<128xf32>
    %68 = vector.shape_cast %67 : vector<128xf32> to vector<1x128xf32>
    %cst_32 = arith.constant 8.000000e+00 : f32
    %69 = vector.broadcast %cst_32 : f32 to vector<1x128xf32>
    %70 = arith.divf %68, %69 : vector<1x128xf32>
    %71 = vector.broadcast %70 : vector<1x128xf32> to vector<8x128xf32>
    %72 = arith.subf %66, %71 : vector<8x128xf32>
    %73 = arith.mulf %72, %72 : vector<8x128xf32>
    %cst_33 = arith.constant dense<0.000000e+00> : vector<128xf32>
    %74 = vector.multi_reduction <add>, %73, %cst_33 [0] : vector<8x128xf32> to vector<128xf32>
    %75 = vector.shape_cast %74 : vector<128xf32> to vector<1x128xf32>
    %cst_34 = arith.constant 8.000000e+00 : f32
    %76 = vector.broadcast %cst_34 : f32 to vector<1x128xf32>
    %77 = arith.divf %75, %76 : vector<1x128xf32>
    %cst_35 = arith.constant 9.99999974E-6 : f32
    %78 = vector.broadcast %cst_35 : f32 to vector<1x128xf32>
    %79 = arith.addf %77, %78 : vector<1x128xf32>
    %80 = math.rsqrt %79 : vector<1x128xf32>
    %81 = vector.broadcast %80 : vector<1x128xf32> to vector<8x128xf32>
    %82 = arith.mulf %72, %81 : vector<8x128xf32>
    %cst_36 = arith.constant 0.00999999977 : f32
    %83 = vector.broadcast %cst_36 : f32 to vector<8x128xf32>
    %84 = arith.mulf %83, %82 : vector<8x128xf32>
    %85 = arith.maximumf %82, %84 : vector<8x128xf32>
    %c0_37 = arith.constant 0 : index
    %c0_38 = arith.constant 0 : index
    %86 = vector.load %arg6[%c0_37, %c0_38] : memref<128x128xf32, #tpu.memory_space<vmem>>, vector<128x128xf32>
    %cst_39 = arith.constant dense<0.000000e+00> : vector<8x128xf32>
    %87 = tpu.matmul %85, %86, %cst_39 {dimension_numbers = #tpu.dot_dimension_numbers<[1], [0], [0], [1], [0, 0, 1, 1], [], []>} : vector<8x128xf32>, vector<128x128xf32>, vector<8x128xf32> -> vector<8x128xf32>
    %c0_40 = arith.constant 0 : index
    %c0_41 = arith.constant 0 : index
    %88 = vector.load %arg7[%c0_40, %c0_41] : memref<1x128xf32, #tpu.memory_space<vmem>>, vector<1x128xf32>
    %89 = vector.broadcast %88 : vector<1x128xf32> to vector<8x128xf32>
    %90 = arith.addf %87, %89 : vector<8x128xf32>
    %c0_42 = arith.constant 0 : index
    %c0_43 = arith.constant 0 : index
    %c0_44 = arith.constant 0 : index
    %91 = vector.load %arg8[%c0_42, %c0_43, %c0_44] : memref<1x8x128xf32, #tpu.memory_space<vmem>>, vector<1x8x128xf32>
    %92 = vector.shape_cast %91 : vector<1x8x128xf32> to vector<8x128xf32>
    %93 = vector.shape_cast %90 : vector<8x128xf32> to vector<1x8x128xf32>
    tpu.vector_store %arg8[%c0_42, %c0_43, %c0_44], %93 {strides = array<i32>} : memref<1x8x128xf32, #tpu.memory_space<vmem>>, vector<1x8x128xf32>,
    return
  }
  func.func @transform_0(%arg0: i32) -> (i32, i32, i32) {
    %c0_i32 = arith.constant 0 : i32
    %c0_i32_0 = arith.constant 0 : i32
    %c0_i32_1 = arith.constant 0 : i32
    return %arg0, %c0_i32, %c0_i32_0 : i32, i32, i32
  }
  func.func @transform_1(%arg0: i32) -> (i32, i32) {
    %c0_i32 = arith.constant 0 : i32
    %c0_i32_0 = arith.constant 0 : i32
    %c0_i32_1 = arith.constant 0 : i32
    return %c0_i32, %c0_i32_0 : i32, i32
  }
  func.func @transform_2(%arg0: i32) -> (i32, i32) {
    %c0_i32 = arith.constant 0 : i32
    %c0_i32_0 = arith.constant 0 : i32
    %c0_i32_1 = arith.constant 0 : i32
    return %c0_i32, %c0_i32_0 : i32, i32
  }
  func.func @transform_3(%arg0: i32) -> (i32, i32) {
    %c0_i32 = arith.constant 0 : i32
    %c0_i32_0 = arith.constant 0 : i32
    %c0_i32_1 = arith.constant 0 : i32
    return %c0_i32, %c0_i32_0 : i32, i32
  }
  func.func @transform_4(%arg0: i32) -> (i32, i32) {
    %c0_i32 = arith.constant 0 : i32
    %c0_i32_0 = arith.constant 0 : i32
    %c0_i32_1 = arith.constant 0 : i32
    return %c0_i32, %c0_i32_0 : i32, i32
  }
  func.func @transform_5(%arg0: i32) -> (i32, i32) {
    %c0_i32 = arith.constant 0 : i32
    %c0_i32_0 = arith.constant 0 : i32
    %c0_i32_1 = arith.constant 0 : i32
    return %c0_i32, %c0_i32_0 : i32, i32
  }
  func.func @transform_6(%arg0: i32) -> (i32, i32) {
    %c0_i32 = arith.constant 0 : i32
    %c0_i32_0 = arith.constant 0 : i32
    %c0_i32_1 = arith.constant 0 : i32
    return %c0_i32, %c0_i32_0 : i32, i32
  }
  func.func @transform_7(%arg0: i32) -> (i32, i32, i32) {
    %c0_i32 = arith.constant 0 : i32
    %c0_i32_0 = arith.constant 0 : i32
    %c0_i32_1 = arith.constant 0 : i32
    return %arg0, %c0_i32, %c0_i32_0 : i32, i32, i32
  }
}

</mosaic_0001>

<llo_original>
// kernel: model_forward.1
$region0: #{model_forward.1}
  #allocation0 [shape = 'u32[]', space=smem, size = 0x4, offset = 0x4, fixed_abs, tag = 'smem constant byte address 0x4 - core index']
  #allocation1 [shape = 'u32[144,128]{1,0:T(1,128)}', space=vmem, size = 0x12000, scoped, tag = 'internal scratch']
  %s0 = inlined_call_operand.hbm [shape: f32[1,8,32], index: 0, kind: input, shape index: {}]
  %s1 = inlined_call_operand.hbm [shape: f32[32,128], index: 1, kind: input, shape index: {}]
  %s2 = inlined_call_operand.hbm [shape: f32[128,128], index: 2, kind: input, shape index: {}]
  %s3 = inlined_call_operand.hbm [shape: f32[128,128], index: 3, kind: input, shape index: {}]
  %s4 = inlined_call_operand.hbm [shape: f32[128,128], index: 4, kind: input, shape index: {}]
  %s5 = inlined_call_operand.hbm [shape: f32[128,128], index: 5, kind: input, shape index: {}]
  %s6 = inlined_call_operand.vmem [shape: f32[1,128], index: 6, kind: input, shape index: {}]
  %s7 = inlined_call_operand.vmem [shape: f32[1,8,128], index: 7, kind: output, shape index: {}]
  %s8 = sld [smem:[#allocation0]]
  $region62: #{model_forward.1} parent=0
    _
  %s10 = ssub.s32 1, %s8
  %s11 = scalar_select 0, %s10, %s8
  $region1: #{model_forward.1} parent=0
    #allocation2 [shape = 'u8[4096]{0}', space=vmem, size = 0x1000, scoped, tag = 'input window, operand 0, single buffered']
    #allocation3 [shape = 's32[1]{0}', space=sflag, size = 0x4, scoped, tag = 'scoped memory for model_forward.1']
    #allocation4 [shape = 'u8[16384]{0}', space=vmem, size = 0x4000, scoped, tag = 'input window, operand 1, single buffered']
    #allocation5 [shape = 's32[1]{0}', space=sflag, size = 0x4, scoped, tag = 'scoped memory for model_forward.1']
    #allocation6 [shape = 'u8[65536]{0}', space=vmem, size = 0x10000, scoped, tag = 'input window, operand 2, single buffered']
    #allocation7 [shape = 'u8[65536]{0}', space=vmem, size = 0x10000, scoped, tag = 'input window, operand 3, single buffered']
    #allocation8 [shape = 's32[1]{0}', space=sflag, size = 0x4, scoped, tag = 'scoped memory for model_forward.1']
    #allocation9 [shape = 'u8[65536]{0}', space=vmem, size = 0x10000, scoped, tag = 'input window, operand 4, single buffered']
    #allocation10 [shape = 'u8[65536]{0}', space=vmem, size = 0x10000, scoped, tag = 'input window, operand 5, single buffered']
    #allocation11 [shape = 's32[1]{0}', space=sflag, size = 0x4, scoped, tag = 'scoped memory for model_forward.1']
    %12 = vsyncpa [#allocation3], 0
    %13 = vsyncpa [#allocation5], 0
    %14 = vsyncpa [#allocation8], 0
    %15 = vsyncpa [#allocation11], 0
    // Predicated region
    $region2: #{model_forward.1} parent=1 // pred_check
      _
    $region3: #{model_forward.1} parent=1 // pred_check_branch
      %17 = sbr.rel (0) target = $region5
    $region4: #{model_forward.1} parent=1 // pred_region
      %s19 = ssub.s32 128, 128
      %20 = vsyncadd [#allocation3], %s19
      %s22 = sshll.u32 [#allocation2], 4
      %s23 = int_to_ptr.vmem [resolvable:$true] %s22
      %25 = dma.hbm_to_vmem [thread:$0]  %s0, 128, %s23, [#allocation3]
    $region5: #{model_forward.1} parent=1 // pred_fallthru
      _
    // Predicated region
    $region6: #{model_forward.1} parent=1 // pred_check
      _
    $region7: #{model_forward.1} parent=1 // pred_check_branch
      %27 = sbr.rel (0) target = $region9
    $region8: #{model_forward.1} parent=1 // pred_region
      %s29 = ssub.s32 512, 512
      %30 = vsyncadd [#allocation5], %s29
      %s31 = sshll.u32 [#allocation4], 4
      %s32 = int_to_ptr.vmem [resolvable:$true] %s31
      %37 = dma.hbm_to_vmem [thread:$0]  %s1, 512, %s32, [#allocation5], 128, 128, 8
    $region9: #{model_forward.1} parent=1 // pred_fallthru
      _
    // Predicated region
    $region10: #{model_forward.1} parent=1 // pred_check
      _
    $region11: #{model_forward.1} parent=1 // pred_check_branch
      %39 = sbr.rel (0) target = $region13
    $region12: #{model_forward.1} parent=1 // pred_region
      %s41 = ssub.s32 2048, 2048
      %42 = vsyncadd [#allocation5], %s41
      %s43 = sshll.u32 [#allocation6], 4
      %s44 = int_to_ptr.vmem [resolvable:$true] %s43
      %49 = dma.hbm_to_vmem [thread:$0]  %s2, 2048, %s44, [#allocation5], 128, 128, 8
    $region13: #{model_forward.1} parent=1 // pred_fallthru
      _
    // Predicated region
    $region14: #{model_forward.1} parent=1 // pred_check
      _
    $region15: #{model_forward.1} parent=1 // pred_check_branch
      %51 = sbr.rel (0) target = $region17
    $region16: #{model_forward.1} parent=1 // pred_region
      %s53 = ssub.s32 2048, 2048
      %54 = vsyncadd [#allocation8], %s53
      %s55 = sshll.u32 [#allocation7], 4
      %s56 = int_to_ptr.vmem [resolvable:$true] %s55
      %61 = dma.hbm_to_vmem [thread:$0]  %s3, 2048, %s56, [#allocation8], 128, 128, 8
    $region17: #{model_forward.1} parent=1 // pred_fallthru
      _
    // Predicated region
    $region18: #{model_forward.1} parent=1 // pred_check
      _
    $region19: #{model_forward.1} parent=1 // pred_check_branch
      %63 = sbr.rel (0) target = $region21
    $region20: #{model_forward.1} parent=1 // pred_region
      %s65 = ssub.s32 2048, 2048
      %66 = vsyncadd [#allocation8], %s65
      %s67 = sshll.u32 [#allocation9], 4
      %s68 = int_to_ptr.vmem [resolvable:$true] %s67
      %73 = dma.hbm_to_vmem [thread:$0]  %s4, 2048, %s68, [#allocation8], 128, 128, 8
    $region21: #{model_forward.1} parent=1 // pred_fallthru
      _
    // Predicated region
    $region22: #{model_forward.1} parent=1 // pred_check
      _
    $region23: #{model_forward.1} parent=1 // pred_check_branch
      %75 = sbr.rel (0) target = $region25
    $region24: #{model_forward.1} parent=1 // pred_region
      %s77 = ssub.s32 2048, 2048
      %78 = vsyncadd [#allocation11], %s77
      %s79 = sshll.u32 [#allocation10], 4
      %s80 = int_to_ptr.vmem [resolvable:$true] %s79
      %85 = dma.hbm_to_vmem [thread:$0]  %s5, 2048, %s80, [#allocation11], 128, 128, 8
    $region25: #{model_forward.1} parent=1 // pred_fallthru
      _
    // Predicated region
    $region26: #{model_forward.1} parent=1 // pred_check
      _
    $region27: #{model_forward.1} parent=1 // pred_check_branch
      %87 = sbr.rel (0) target = $region29
    $region28: #{model_forward.1} parent=1 // pred_region
      _
    $region29: #{model_forward.1} parent=1 // pred_fallthru
      _
    // Predicated region
    $region30: #{model_forward.1} parent=1 // pred_check
      _
    $region31: #{model_forward.1} parent=1 // pred_check_branch
      %89 = sbr.rel (0) target = $region33
    $region32: #{model_forward.1} parent=1 // pred_region
      %90 = dma.done [#allocation3], 128
    $region33: #{model_forward.1} parent=1 // pred_fallthru
      _
    // Predicated region
    $region34: #{model_forward.1} parent=1 // pred_check
      _
    $region35: #{model_forward.1} parent=1 // pred_check_branch
      %92 = sbr.rel (0) target = $region37
    $region36: #{model_forward.1} parent=1 // pred_region
      %93 = dma.done [#allocation5], 512
    $region37: #{model_forward.1} parent=1 // pred_fallthru
      _
    // Predicated region
    $region38: #{model_forward.1} parent=1 // pred_check
      _
    $region39: #{model_forward.1} parent=1 // pred_check_branch
      %95 = sbr.rel (0) target = $region41
    $region40: #{model_forward.1} parent=1 // pred_region
      %96 = dma.done [#allocation5], 2048
    $region41: #{model_forward.1} parent=1 // pred_fallthru
      _
    // Predicated region
    $region42: #{model_forward.1} parent=1 // pred_check
      _
    $region43: #{model_forward.1} parent=1 // pred_check_branch
      %98 = sbr.rel (0) target = $region45
    $region44: #{model_forward.1} parent=1 // pred_region
      %99 = dma.done [#allocation8], 2048
    $region45: #{model_forward.1} parent=1 // pred_fallthru
      _
    // Predicated region
    $region46: #{model_forward.1} parent=1 // pred_check
      _
    $region47: #{model_forward.1} parent=1 // pred_check_branch
      %101 = sbr.rel (0) target = $region49
    $region48: #{model_forward.1} parent=1 // pred_region
      %102 = dma.done [#allocation8], 2048
    $region49: #{model_forward.1} parent=1 // pred_fallthru
      _
    // Predicated region
    $region50: #{model_forward.1} parent=1 // pred_check
      _
    $region51: #{model_forward.1} parent=1 // pred_check_branch
      %104 = sbr.rel (0) target = $region53
    $region52: #{model_forward.1} parent=1 // pred_region
      %105 = dma.done [#allocation11], 2048
    $region53: #{model_forward.1} parent=1 // pred_fallthru
      _
    %v106 = vld [vmem:[#allocation2] sm:$0xff]
    %v107 = vld [vmem:[#allocation4] sm:$0xff]
    %v108 = vld [vmem:[#allocation4 + $0x8] sm:$0xff]
    %v109 = vld [vmem:[#allocation4 + $0x10] sm:$0xff]
    %v110 = vld [vmem:[#allocation4 + $0x18] sm:$0xff]
    %v111 = vld [vmem:[#allocation6] sm:$0xff]
    %v112 = vld [vmem:[#allocation6 + $0x8] sm:$0xff]
    %v113 = vld [vmem:[#allocation6 + $0x10] sm:$0xff]
    %v114 = vld [vmem:[#allocation6 + $0x18] sm:$0xff]
    %v115 = vld [vmem:[#allocation6 + $0x20] sm:$0xff]
    %v116 = vld [vmem:[#allocation6 + $0x28] sm:$0xff]
    %v117 = vld [vmem:[#allocation6 + $0x30] sm:$0xff]
    %v118 = vld [vmem:[#allocation6 + $0x38] sm:$0xff]
    %v119 = vld [vmem:[#allocation6 + $0x40] sm:$0xff]
    %v120 = vld [vmem:[#allocation6 + $0x48] sm:$0xff]
    %v121 = vld [vmem:[#allocation6 + $0x50] sm:$0xff]
    %v122 = vld [vmem:[#allocation6 + $0x58] sm:$0xff]
    %v123 = vld [vmem:[#allocation6 + $0x60] sm:$0xff]
    %v124 = vld [vmem:[#allocation6 + $0x68] sm:$0xff]
    %v125 = vld [vmem:[#allocation6 + $0x70] sm:$0xff]
    %v126 = vld [vmem:[#allocation6 + $0x78] sm:$0xff]
    %vm127 = vcmask 261120
    %v129 = vsel %vm127, %v106, 0
    %131 = vmatprep.subr.mxu0 0.0
    %132 = vmatpush1.msra.mxu0 %v107
    %133 = vmatprep.subr.mxu0 0.0
    %134 = vmatpush1.msra.mxu0 %v108
    %135 = vmatprep.subr.mxu0 0.0
    %136 = vmatpush1.msra.mxu0 %v109
    %137 = vmatprep.subr.mxu0 0.0
    %138 = vmatpush1.msra.mxu0 %v110
    %139 = vmatprep.subr.mxu0 0.0
    %140 = vmatpush1.msra.mxu0 0.0
    %141 = vmatprep.subr.mxu0 0.0
    %142 = vmatpush1.msra.mxu0 0.0
    %143 = vmatprep.subr.mxu0 0.0
    %144 = vmatpush1.msra.mxu0 0.0
    %145 = vmatprep.subr.mxu0 0.0
    %146 = vmatpush1.msra.mxu0 0.0
    %147 = vmatprep.subr.mxu0 0.0
    %148 = vmatpush1.msra.mxu0 0.0
    %149 = vmatprep.subr.mxu0 0.0
    %150 = vmatpush1.msra.mxu0 0.0
    %151 = vmatprep.subr.mxu0 0.0
    %152 = vmatpush1.msra.mxu0 0.0
    %153 = vmatprep.subr.mxu0 0.0
    %154 = vmatpush1.msra.mxu0 0.0
    %155 = vmatprep.subr.mxu0 0.0
    %156 = vmatpush1.msra.mxu0 0.0
    %157 = vmatprep.subr.mxu0 0.0
    %158 = vmatpush1.msra.mxu0 0.0
    %159 = vmatprep.subr.mxu0 0.0
    %160 = vmatpush1.msra.mxu0 0.0
    %161 = vmatprep.subr.mxu0 0.0
    %162 = vmatpush1.msra.mxu0 0.0
    %163 = vmatprep.subr.mxu0 0.0
    %164 = vmatpush1.msra.mxu0 0.0
    %165 = vmatprep.subr.mxu0 0.0
    %166 = vmatpush1.msra.mxu0 0.0
    %167 = vmatprep.subr.mxu0 0.0
    %168 = vmatpush1.msra.mxu0 0.0
    %169 = vmatprep.subr.mxu0 0.0
    %170 = vmatpush1.msra.mxu0 0.0
    %171 = vmatprep.subr.mxu0 0.0
    %172 = vmatpush1.msra.mxu0 0.0
    %173 = vmatprep.subr.mxu0 0.0
    %174 = vmatpush1.msra.mxu0 0.0
    %175 = vmatprep.subr.mxu0 0.0
    %176 = vmatpush1.msra.mxu0 0.0
    %177 = vmatprep.subr.mxu0 0.0
    %178 = vmatpush1.msra.mxu0 0.0
    %179 = vmatprep.subr.mxu0 0.0
    %180 = vmatpush1.msra.mxu0 0.0
    %181 = vmatprep.subr.mxu0 0.0
    %182 = vmatpush1.msra.mxu0 0.0
    %183 = vmatprep.subr.mxu0 0.0
    %184 = vmatpush1.msra.mxu0 0.0
    %185 = vmatprep.subr.mxu0 0.0
    %186 = vmatpush1.msra.mxu0 0.0
    %187 = vmatprep.subr.mxu0 0.0
    %188 = vmatpush1.msra.mxu0 0.0
    %189 = vmatprep.subr.mxu0 0.0
    %190 = vmatpush1.msra.mxu0 0.0
    %191 = vmatprep.subr.mxu0 0.0
    %192 = vmatpush1.msra.mxu0 0.0
    %193 = vmatprep.subr.mxu0 0.0
    %194 = vmatpush1.msra.mxu0 0.0
    %195 = vmatprep.mubr.f32.mxu0 0.0
    %196 = vmatmul.mubr.f32.gmra.mrb[0].mxu0 %v129
    %v197 = vpop.f32.mrb[0].mxu0
    %v198 = vadd.f32 0.0, %v197
    %v199 = vpop.f32.mrb[0].mxu0
    %200 = vdwg.mxu0
    %v201 = vrot.slane %v198, 4
    %v202 = vadd.f32 %v198, %v201
    %v203 = vrot.slane %v202, 2
    %v204 = vadd.f32 %v202, %v203
    %v205 = vrot.slane %v204, 1
    %v206 = vadd.f32 %v204, %v205
    %v207 = vrcp.pop 8.0
    %v208 = vmul.f32 %v206, %v207
    %v209 = vsub.f32 %v198, %v208
    %v210 = vmul.f32 %v209, %v209
    %v211 = vrot.slane %v210, 4
    %v212 = vadd.f32 %v210, %v211
    %v213 = vrot.slane %v212, 2
    %v214 = vadd.f32 %v212, %v213
    %v215 = vrot.slane %v214, 1
    %v216 = vadd.f32 %v214, %v215
    %v217 = vmul.f32 %v216, %v207
    %v218 = vadd.f32 %v217, 1e-05
    %v219 = vrsqrt.pop %v218
    %v220 = vmul.f32 %v209, %v219
    %v221 = vmul.f32 %v220, 0.01
    %v222 = vmax.f32 %v220, %v221
    %223 = vmatprep.subr.mxu0 0.0
    %224 = vmatpush1.msra.mxu0 %v111
    %225 = vmatprep.subr.mxu0 0.0
    %226 = vmatpush1.msra.mxu0 %v112
    %227 = vmatprep.subr.mxu0 0.0
    %228 = vmatpush1.msra.mxu0 %v113
    %229 = vmatprep.subr.mxu0 0.0
    %230 = vmatpush1.msra.mxu0 %v114
    %231 = vmatprep.subr.mxu0 0.0
    %232 = vmatpush1.msra.mxu0 %v115
    %233 = vmatprep.subr.mxu0 0.0
    %234 = vmatpush1.msra.mxu0 %v116
    %235 = vmatprep.subr.mxu0 0.0
    %236 = vmatpush1.msra.mxu0 %v117
    %237 = vmatprep.subr.mxu0 0.0
    %238 = vmatpush1.msra.mxu0 %v118
    %239 = vmatprep.subr.mxu0 0.0
    %240 = vmatpush1.msra.mxu0 %v119
    %241 = vmatprep.subr.mxu0 0.0
    %242 = vmatpush1.msra.mxu0 %v120
    %243 = vmatprep.subr.mxu0 0.0
    %244 = vmatpush1.msra.mxu0 %v121
    %245 = vmatprep.subr.mxu0 0.0
    %246 = vmatpush1.msra.mxu0 %v122
    %247 = vmatprep.subr.mxu0 0.0
    %248 = vmatpush1.msra.mxu0 %v123
    %249 = vmatprep.subr.mxu0 0.0
    %250 = vmatpush1.msra.mxu0 %v124
    %251 = vmatprep.subr.mxu0 0.0
    %252 = vmatpush1.msra.mxu0 %v125
    %253 = vmatprep.subr.mxu0 0.0
    %254 = vmatpush1.msra.mxu0 %v126
    %255 = vmatprep.subr.mxu0 0.0
    %256 = vmatpush1.msra.mxu0 0.0
    %257 = vmatprep.subr.mxu0 0.0
    %258 = vmatpush1.msra.mxu0 0.0
    %259 = vmatprep.subr.mxu0 0.0
    %260 = vmatpush1.msra.mxu0 0.0
    %261 = vmatprep.subr.mxu0 0.0
    %262 = vmatpush1.msra.mxu0 0.0
    %263 = vmatprep.subr.mxu0 0.0
    %264 = vmatpush1.msra.mxu0 0.0
    %265 = vmatprep.subr.mxu0 0.0
    %266 = vmatpush1.msra.mxu0 0.0
    %267 = vmatprep.subr.mxu0 0.0
    %268 = vmatpush1.msra.mxu0 0.0
    %269 = vmatprep.subr.mxu0 0.0
    %270 = vmatpush1.msra.mxu0 0.0
    %271 = vmatprep.subr.mxu0 0.0
    %272 = vmatpush1.msra.mxu0 0.0
    %273 = vmatprep.subr.mxu0 0.0
    %274 = vmatpush1.msra.mxu0 0.0
    %275 = vmatprep.subr.mxu0 0.0
    %276 = vmatpush1.msra.mxu0 0.0
    %277 = vmatprep.subr.mxu0 0.0
    %278 = vmatpush1.msra.mxu0 0.0
    %279 = vmatprep.subr.mxu0 0.0
    %280 = vmatpush1.msra.mxu0 0.0
    %281 = vmatprep.subr.mxu0 0.0
    %282 = vmatpush1.msra.mxu0 0.0
    %283 = vmatprep.subr.mxu0 0.0
    %284 = vmatpush1.msra.mxu0 0.0
    %285 = vmatprep.subr.mxu0 0.0
    %286 = vmatpush1.msra.mxu0 0.0
    %287 = vmatprep.mubr.f32.mxu0 0.0
    %288 = vmatmul.mubr.f32.gmra.mrb[0].mxu0 %v222
    %v289 = vpop.f32.mrb[0].mxu0
    %v290 = vadd.f32 0.0, %v289
    %v291 = vpop.f32.mrb[0].mxu0
    %292 = vdwg.mxu0
    %v293 = vrot.slane %v290, 4
    %v294 = vadd.f32 %v290, %v293
    %v295 = vrot.slane %v294, 2
    %v296 = vadd.f32 %v294, %v295
    %v297 = vrot.slane %v296, 1
    %v298 = vadd.f32 %v296, %v297
    %v299 = vmul.f32 %v298, %v207
    %v300 = vsub.f32 %v290, %v299
    %v301 = vmul.f32 %v300, %v300
    %v302 = vrot.slane %v301, 4
    %v303 = vadd.f32 %v301, %v302
    %v304 = vrot.slane %v303, 2
    %v305 = vadd.f32 %v303, %v304
    %v306 = vrot.slane %v305, 1
    %v307 = vadd.f32 %v305, %v306
    %v308 = vmul.f32 %v307, %v207
    %v309 = vadd.f32 %v308, 1e-05
    %v310 = vrsqrt.pop %v309
    %v311 = vmul.f32 %v300, %v310
    %v312 = vmul.f32 %v311, 0.01
    %v313 = vmax.f32 %v311, %v312
    %v314 = vld [vmem:[#allocation7] sm:$0xff]
    %v315 = vld [vmem:[#allocation7 + $0x8] sm:$0xff]
    %v316 = vld [vmem:[#allocation7 + $0x10] sm:$0xff]
    %v317 = vld [vmem:[#allocation7 + $0x18] sm:$0xff]
    %v318 = vld [vmem:[#allocation7 + $0x20] sm:$0xff]
    %v319 = vld [vmem:[#allocation7 + $0x28] sm:$0xff]
    %v320 = vld [vmem:[#allocation7 + $0x30] sm:$0xff]
    %v321 = vld [vmem:[#allocation7 + $0x38] sm:$0xff]
    %v322 = vld [vmem:[#allocation7 + $0x40] sm:$0xff]
    %v323 = vld [vmem:[#allocation7 + $0x48] sm:$0xff]
    %v324 = vld [vmem:[#allocation7 + $0x50] sm:$0xff]
    %v325 = vld [vmem:[#allocation7 + $0x58] sm:$0xff]
    %v326 = vld [vmem:[#allocation7 + $0x60] sm:$0xff]
    %v327 = vld [vmem:[#allocation7 + $0x68] sm:$0xff]
    %v328 = vld [vmem:[#allocation7 + $0x70] sm:$0xff]
    %v329 = vld [vmem:[#allocation7 + $0x78] sm:$0xff]
    %v330 = vld [vmem:[#allocation9] sm:$0xff]
    %v331 = vld [vmem:[#allocation9 + $0x8] sm:$0xff]
    %v332 = vld [vmem:[#allocation9 + $0x10] sm:$0xff]
    %v333 = vld [vmem:[#allocation9 + $0x18] sm:$0xff]
    %v334 = vld [vmem:[#allocation9 + $0x20] sm:$0xff]
    %v335 = vld [vmem:[#allocation9 + $0x28] sm:$0xff]
    %v336 = vld [vmem:[#allocation9 + $0x30] sm:$0xff]
    %v337 = vld [vmem:[#allocation9 + $0x38] sm:$0xff]
    %v338 = vld [vmem:[#allocation9 + $0x40] sm:$0xff]
    %v339 = vld [vmem:[#allocation9 + $0x48] sm:$0xff]
    %v340 = vld [vmem:[#allocation9 + $0x50] sm:$0xff]
    %v341 = vld [vmem:[#allocation9 + $0x58] sm:$0xff]
    %v342 = vld [vmem:[#allocation9 + $0x60] sm:$0xff]
    %v343 = vld [vmem:[#allocation9 + $0x68] sm:$0xff]
    %v344 = vld [vmem:[#allocation9 + $0x70] sm:$0xff]
    %v345 = vld [vmem:[#allocation9 + $0x78] sm:$0xff]
    %346 = vmatprep.subr.mxu0 0.0
    %347 = vmatpush1.msra.mxu0 %v314
    %348 = vmatprep.subr.mxu0 0.0
    %349 = vmatpush1.msra.mxu0 %v315
    %350 = vmatprep.subr.mxu0 0.0
    %351 = vmatpush1.msra.mxu0 %v316
    %352 = vmatprep.subr.mxu0 0.0
    %353 = vmatpush1.msra.mxu0 %v317
    %354 = vmatprep.subr.mxu0 0.0
    %355 = vmatpush1.msra.mxu0 %v318
    %356 = vmatprep.subr.mxu0 0.0
    %357 = vmatpush1.msra.mxu0 %v319
    %358 = vmatprep.subr.mxu0 0.0
    %359 = vmatpush1.msra.mxu0 %v320
    %360 = vmatprep.subr.mxu0 0.0
    %361 = vmatpush1.msra.mxu0 %v321
    %362 = vmatprep.subr.mxu0 0.0
    %363 = vmatpush1.msra.mxu0 %v322
    %364 = vmatprep.subr.mxu0 0.0
    %365 = vmatpush1.msra.mxu0 %v323
    %366 = vmatprep.subr.mxu0 0.0
    %367 = vmatpush1.msra.mxu0 %v324
    %368 = vmatprep.subr.mxu0 0.0
    %369 = vmatpush1.msra.mxu0 %v325
    %370 = vmatprep.subr.mxu0 0.0
    %371 = vmatpush1.msra.mxu0 %v326
    %372 = vmatprep.subr.mxu0 0.0
    %373 = vmatpush1.msra.mxu0 %v327
    %374 = vmatprep.subr.mxu0 0.0
    %375 = vmatpush1.msra.mxu0 %v328
    %376 = vmatprep.subr.mxu0 0.0
    %377 = vmatpush1.msra.mxu0 %v329
    %378 = vmatprep.subr.mxu0 0.0
    %379 = vmatpush1.msra.mxu0 0.0
    %380 = vmatprep.subr.mxu0 0.0
    %381 = vmatpush1.msra.mxu0 0.0
    %382 = vmatprep.subr.mxu0 0.0
    %383 = vmatpush1.msra.mxu0 0.0
    %384 = vmatprep.subr.mxu0 0.0
    %385 = vmatpush1.msra.mxu0 0.0
    %386 = vmatprep.subr.mxu0 0.0
    %387 = vmatpush1.msra.mxu0 0.0
    %388 = vmatprep.subr.mxu0 0.0
    %389 = vmatpush1.msra.mxu0 0.0
    %390 = vmatprep.subr.mxu0 0.0
    %391 = vmatpush1.msra.mxu0 0.0
    %392 = vmatprep.subr.mxu0 0.0
    %393 = vmatpush1.msra.mxu0 0.0
    %394 = vmatprep.subr.mxu0 0.0
    %395 = vmatpush1.msra.mxu0 0.0
    %396 = vmatprep.subr.mxu0 0.0
    %397 = vmatpush1.msra.mxu0 0.0
    %398 = vmatprep.subr.mxu0 0.0
    %399 = vmatpush1.msra.mxu0 0.0
    %400 = vmatprep.subr.mxu0 0.0
    %401 = vmatpush1.msra.mxu0 0.0
    %402 = vmatprep.subr.mxu0 0.0
    %403 = vmatpush1.msra.mxu0 0.0
    %404 = vmatprep.subr.mxu0 0.0
    %405 = vmatpush1.msra.mxu0 0.0
    %406 = vmatprep.subr.mxu0 0.0
    %407 = vmatpush1.msra.mxu0 0.0
    %408 = vmatprep.subr.mxu0 0.0
    %409 = vmatpush1.msra.mxu0 0.0
    %410 = vmatprep.mubr.f32.mxu0 0.0
    %411 = vmatmul.mubr.f32.gmra.mrb[0].mxu0 %v313
    %v412 = vpop.f32.mrb[0].mxu0
    %v413 = vadd.f32 0.0, %v412
    %v414 = vpop.f32.mrb[0].mxu0
    %415 = vdwg.mxu0
    %v416 = vrot.slane %v413, 4
    %v417 = vadd.f32 %v413, %v416
    %v418 = vrot.slane %v417, 2
    %v419 = vadd.f32 %v417, %v418
    %v420 = vrot.slane %v419, 1
    %v421 = vadd.f32 %v419, %v420
    %v422 = vmul.f32 %v421, %v207
    %v423 = vsub.f32 %v413, %v422
    %v424 = vmul.f32 %v423, %v423
    %v425 = vrot.slane %v424, 4
    %v426 = vadd.f32 %v424, %v425
    %v427 = vrot.slane %v426, 2
    %v428 = vadd.f32 %v426, %v427
    %v429 = vrot.slane %v428, 1
    %v430 = vadd.f32 %v428, %v429
    %v431 = vmul.f32 %v430, %v207
    %v432 = vadd.f32 %v431, 1e-05
    %v433 = vrsqrt.pop %v432
    %v434 = vmul.f32 %v423, %v433
    %v435 = vmul.f32 %v434, 0.01
    %v436 = vmax.f32 %v434, %v435
    %437 = vmatprep.subr.mxu0 0.0
    %438 = vmatpush1.msra.mxu0 %v330
    %439 = vmatprep.subr.mxu0 0.0
    %440 = vmatpush1.msra.mxu0 %v331
    %441 = vmatprep.subr.mxu0 0.0
    %442 = vmatpush1.msra.mxu0 %v332
    %443 = vmatprep.subr.mxu0 0.0
    %444 = vmatpush1.msra.mxu0 %v333
    %445 = vmatprep.subr.mxu0 0.0
    %446 = vmatpush1.msra.mxu0 %v334
    %447 = vmatprep.subr.mxu0 0.0
    %448 = vmatpush1.msra.mxu0 %v335
    %449 = vmatprep.subr.mxu0 0.0
    %450 = vmatpush1.msra.mxu0 %v336
    %451 = vmatprep.subr.mxu0 0.0
    %452 = vmatpush1.msra.mxu0 %v337
    %453 = vmatprep.subr.mxu0 0.0
    %454 = vmatpush1.msra.mxu0 %v338
    %455 = vmatprep.subr.mxu0 0.0
    %456 = vmatpush1.msra.mxu0 %v339
    %457 = vmatprep.subr.mxu0 0.0
    %458 = vmatpush1.msra.mxu0 %v340
    %459 = vmatprep.subr.mxu0 0.0
    %460 = vmatpush1.msra.mxu0 %v341
    %461 = vmatprep.subr.mxu0 0.0
    %462 = vmatpush1.msra.mxu0 %v342
    %463 = vmatprep.subr.mxu0 0.0
    %464 = vmatpush1.msra.mxu0 %v343
    %465 = vmatprep.subr.mxu0 0.0
    %466 = vmatpush1.msra.mxu0 %v344
    %467 = vmatprep.subr.mxu0 0.0
    %468 = vmatpush1.msra.mxu0 %v345
    %469 = vmatprep.subr.mxu0 0.0
    %470 = vmatpush1.msra.mxu0 0.0
    %471 = vmatprep.subr.mxu0 0.0
    %472 = vmatpush1.msra.mxu0 0.0
    %473 = vmatprep.subr.mxu0 0.0
    %474 = vmatpush1.msra.mxu0 0.0
    %475 = vmatprep.subr.mxu0 0.0
    %476 = vmatpush1.msra.mxu0 0.0
    %477 = vmatprep.subr.mxu0 0.0
    %478 = vmatpush1.msra.mxu0 0.0
    %479 = vmatprep.subr.mxu0 0.0
    %480 = vmatpush1.msra.mxu0 0.0
    %481 = vmatprep.subr.mxu0 0.0
    %482 = vmatpush1.msra.mxu0 0.0
    %483 = vmatprep.subr.mxu0 0.0
    %484 = vmatpush1.msra.mxu0 0.0
    %485 = vmatprep.subr.mxu0 0.0
    %486 = vmatpush1.msra.mxu0 0.0
    %487 = vmatprep.subr.mxu0 0.0
    %488 = vmatpush1.msra.mxu0 0.0
    %489 = vmatprep.subr.mxu0 0.0
    %490 = vmatpush1.msra.mxu0 0.0
    %491 = vmatprep.subr.mxu0 0.0
    %492 = vmatpush1.msra.mxu0 0.0
    %493 = vmatprep.subr.mxu0 0.0
    %494 = vmatpush1.msra.mxu0 0.0
    %495 = vmatprep.subr.mxu0 0.0
    %496 = vmatpush1.msra.mxu0 0.0
    %497 = vmatprep.subr.mxu0 0.0
    %498 = vmatpush1.msra.mxu0 0.0
    %499 = vmatprep.subr.mxu0 0.0
    %500 = vmatpush1.msra.mxu0 0.0
    %501 = vmatprep.mubr.f32.mxu0 0.0
    %502 = vmatmul.mubr.f32.gmra.mrb[0].mxu0 %v436
    %v503 = vpop.f32.mrb[0].mxu0
    %v504 = vadd.f32 0.0, %v503
    %v505 = vpop.f32.mrb[0].mxu0
    %506 = vdwg.mxu0
    %v507 = vrot.slane %v504, 4
    %v508 = vadd.f32 %v504, %v507
    %v509 = vrot.slane %v508, 2
    %v510 = vadd.f32 %v508, %v509
    %v511 = vrot.slane %v510, 1
    %v512 = vadd.f32 %v510, %v511
    %v513 = vmul.f32 %v512, %v207
    %v514 = vsub.f32 %v504, %v513
    %v515 = vmul.f32 %v514, %v514
    %v516 = vrot.slane %v515, 4
    %v517 = vadd.f32 %v515, %v516
    %v518 = vrot.slane %v517, 2
    %v519 = vadd.f32 %v517, %v518
    %v520 = vrot.slane %v519, 1
    %v521 = vadd.f32 %v519, %v520
    %v522 = vmul.f32 %v521, %v207
    %v523 = vadd.f32 %v522, 1e-05
    %v524 = vrsqrt.pop %v523
    %v525 = vmul.f32 %v514, %v524
    %v526 = vmul.f32 %v525, 0.01
    %v527 = vmax.f32 %v525, %v526
    %v528 = vld [vmem:[#allocation10] sm:$0xff]
    %v529 = vld [vmem:[#allocation10 + $0x8] sm:$0xff]
    %v530 = vld [vmem:[#allocation10 + $0x10] sm:$0xff]
    %v531 = vld [vmem:[#allocation10 + $0x18] sm:$0xff]
    %v532 = vld [vmem:[#allocation10 + $0x20] sm:$0xff]
    %v533 = vld [vmem:[#allocation10 + $0x28] sm:$0xff]
    %v534 = vld [vmem:[#allocation10 + $0x30] sm:$0xff]
    %v535 = vld [vmem:[#allocation10 + $0x38] sm:$0xff]
    %v536 = vld [vmem:[#allocation10 + $0x40] sm:$0xff]
    %v537 = vld [vmem:[#allocation10 + $0x48] sm:$0xff]
    %v538 = vld [vmem:[#allocation10 + $0x50] sm:$0xff]
    %v539 = vld [vmem:[#allocation10 + $0x58] sm:$0xff]
    %v540 = vld [vmem:[#allocation10 + $0x60] sm:$0xff]
    %v541 = vld [vmem:[#allocation10 + $0x68] sm:$0xff]
    %v542 = vld [vmem:[#allocation10 + $0x70] sm:$0xff]
    %v543 = vld [vmem:[#allocation10 + $0x78] sm:$0xff]
    %v544 = vld [vmem:[%s6] sm:$0x1]
    %v546 = vlaneseq
    %v547 = vshrl.u32 %v546, 7
    %v548 = vsub.s32 0, %v547
    %v549 = vrot.slane %v544, %v548
    %551 = vmatprep.subr.mxu0 0.0
    %552 = vmatpush1.msra.mxu0 %v528
    %553 = vmatprep.subr.mxu0 0.0
    %554 = vmatpush1.msra.mxu0 %v529
    %555 = vmatprep.subr.mxu0 0.0
    %556 = vmatpush1.msra.mxu0 %v530
    %557 = vmatprep.subr.mxu0 0.0
    %558 = vmatpush1.msra.mxu0 %v531
    %559 = vmatprep.subr.mxu0 0.0
    %560 = vmatpush1.msra.mxu0 %v532
    %561 = vmatprep.subr.mxu0 0.0
    %562 = vmatpush1.msra.mxu0 %v533
    %563 = vmatprep.subr.mxu0 0.0
    %564 = vmatpush1.msra.mxu0 %v534
    %565 = vmatprep.subr.mxu0 0.0
    %566 = vmatpush1.msra.mxu0 %v535
    %567 = vmatprep.subr.mxu0 0.0
    %568 = vmatpush1.msra.mxu0 %v536
    %569 = vmatprep.subr.mxu0 0.0
    %570 = vmatpush1.msra.mxu0 %v537
    %571 = vmatprep.subr.mxu0 0.0
    %572 = vmatpush1.msra.mxu0 %v538
    %573 = vmatprep.subr.mxu0 0.0
    %574 = vmatpush1.msra.mxu0 %v539
    %575 = vmatprep.subr.mxu0 0.0
    %576 = vmatpush1.msra.mxu0 %v540
    %577 = vmatprep.subr.mxu0 0.0
    %578 = vmatpush1.msra.mxu0 %v541
    %579 = vmatprep.subr.mxu0 0.0
    %580 = vmatpush1.msra.mxu0 %v542
    %581 = vmatprep.subr.mxu0 0.0
    %582 = vmatpush1.msra.mxu0 %v543
    %583 = vmatprep.subr.mxu0 0.0
    %584 = vmatpush1.msra.mxu0 0.0
    %585 = vmatprep.subr.mxu0 0.0
    %586 = vmatpush1.msra.mxu0 0.0
    %587 = vmatprep.subr.mxu0 0.0
    %588 = vmatpush1.msra.mxu0 0.0
    %589 = vmatprep.subr.mxu0 0.0
    %590 = vmatpush1.msra.mxu0 0.0
    %591 = vmatprep.subr.mxu0 0.0
    %592 = vmatpush1.msra.mxu0 0.0
    %593 = vmatprep.subr.mxu0 0.0
    %594 = vmatpush1.msra.mxu0 0.0
    %595 = vmatprep.subr.mxu0 0.0
    %596 = vmatpush1.msra.mxu0 0.0
    %597 = vmatprep.subr.mxu0 0.0
    %598 = vmatpush1.msra.mxu0 0.0
    %599 = vmatprep.subr.mxu0 0.0
    %600 = vmatpush1.msra.mxu0 0.0
    %601 = vmatprep.subr.mxu0 0.0
    %602 = vmatpush1.msra.mxu0 0.0
    %603 = vmatprep.subr.mxu0 0.0
    %604 = vmatpush1.msra.mxu0 0.0
    %605 = vmatprep.subr.mxu0 0.0
    %606 = vmatpush1.msra.mxu0 0.0
    %607 = vmatprep.subr.mxu0 0.0
    %608 = vmatpush1.msra.mxu0 0.0
    %609 = vmatprep.subr.mxu0 0.0
    %610 = vmatpush1.msra.mxu0 0.0
    %611 = vmatprep.subr.mxu0 0.0
    %612 = vmatpush1.msra.mxu0 0.0
    %613 = vmatprep.subr.mxu0 0.0
    %614 = vmatpush1.msra.mxu0 0.0
    %615 = vmatprep.mubr.f32.mxu0 0.0
    %616 = vmatmul.mubr.f32.gmra.mrb[0].mxu0 %v527
    %v617 = vpop.f32.mrb[0].mxu0
    %v618 = vadd.f32 %v549, %v617
    %v619 = vpop.f32.mrb[0].mxu0
    %620 = vdwg.mxu0
    %621 = vst [vmem:[%s7] sm:$0xff] %v618
    // Predicated region
    $region54: #{model_forward.1} parent=1 // pred_check
      _
    $region55: #{model_forward.1} parent=1 // pred_check_branch
      %623 = sbr.rel (0) target = $region57
    $region56: #{model_forward.1} parent=1 // pred_region
      _
    $region57: #{model_forward.1} parent=1 // pred_fallthru
      _
    // Predicated region
    $region58: #{model_forward.1} parent=1 // pred_check
      _
    $region59: #{model_forward.1} parent=1 // pred_check_branch
      %625 = sbr.rel (0) target = $region61
    $region60: #{model_forward.1} parent=1 // pred_region
      _
    $region61: #{model_forward.1} parent=1 // pred_fallthru
      _
    %626 = vsyncpa [#allocation3], 1
    %627 = vsyncpa [#allocation5], 1
    %628 = vsyncpa [#allocation8], 1
    %629 = vsyncpa [#allocation11], 1

</llo_original>
